<compile_context>
chip_gen: v5e
topology: v5e:2x2
jax: 0.10.0
libtpu: 0.0.40
codegen_flags: <defaults>
</compile_context>

<pallas_src>
import sys
import functools

import jax
import jax.numpy as jnp
from jax.experimental import pallas as pl
from jax.experimental.pallas import tpu as pltpu

_EPS = float(sys.float_info.epsilon)  # 2.220446049250313e-16
_LANE = 128

# Both arrays together (f32) must fit comfortably in VMEM for the fused path.
# 24 MiB keeps headroom on v7x (64 MiB physical VMEM per TC).
_FUSED_MAX_TOTAL_BYTES = 24 * 1024 * 1024

# Streaming path block size (rows of 128 lanes).  2048 x 128 x 4 B = 1 MiB per
# input block; x2 inputs x2 pipeline buffers = 4 MiB -> fits default scoped VMEM
# on v5e/v6e/v7x while amortizing the ~0.35 us per-grid-step overhead.
_BLOCK_ROWS = 2048


def _to_2d(x):
    """Flatten to (R, 128) f32.

    Free (layout-preserving reshape, no HBM copy) when numel % 128 == 0, which is
    the normal case for NCHW feature maps.  Otherwise pads the tail with zeros
    (exact for this loss: zero elements contribute 0 to every sum).
    """
    flat = x.reshape(-1).astype(jnp.float32)
    n = flat.shape[0]
    pad = (-n) % _LANE
    if pad:
        # TODO(synk): only hit for numel not divisible by 128; could be replaced
        # by element-level masking to avoid the copy entirely.
        flat = jnp.pad(flat, (0, pad))
    return flat.reshape(-1, _LANE)


# ---------------------------------------------------------------------------
# Fused path: whole arrays resident in VMEM, single grid-less kernel.
# ---------------------------------------------------------------------------
def _fused_kernel(inp_ref, trg_ref, out_ref):
    inp = inp_ref[...]
    trg = trg_ref[...]
    inp_n = inp * (1.0 / jnp.sum(inp))
    trg_n = trg * (1.0 / jnp.sum(trg))
    out_ref[0] = jnp.sum(trg_n * jnp.log(_EPS + trg_n / (inp_n + _EPS)))


def _kld_fused(inp2d, trg2d):
    out = pl.pallas_call(
        _fused_kernel,
        out_shape=jax.ShapeDtypeStruct((1,), jnp.float32),
        in_specs=[pl.BlockSpec(memory_space=pltpu.MemorySpace.VMEM)] * 2,
        out_specs=pl.BlockSpec(memory_space=pltpu.MemorySpace.SMEM),
        compiler_params=pltpu.CompilerParams(vmem_limit_bytes=48 * 1024 * 1024),
    )(inp2d, trg2d)
    return out[0]


# ---------------------------------------------------------------------------
# Streaming path: two passes with large blocks and parallel per-block partials.
# ---------------------------------------------------------------------------
def _masked_tiles(inp_ref, trg_ref, block_rows, valid_rows):
    """Load the two tiles; zero rows beyond `valid_rows` (ragged last block)."""
    inp = inp_ref[...]
    trg = trg_ref[...]
    if valid_rows % block_rows != 0:  # static check: mask only if grid is ragged
        row0 = pl.program_id(0) * block_rows
        rows = row0 + jax.lax.broadcasted_iota(jnp.int32, inp.shape, 0)
        keep = rows < valid_rows
        inp = jnp.where(keep, inp, 0.0)
        trg = jnp.where(keep, trg, 0.0)
    return inp, trg


def _partial_sums_kernel(inp_ref, trg_ref, si_ref, st_ref, *, block_rows, valid_rows):
    """Per-block lane-wise partial sums of inp and trg (no serial accumulation)."""
    inp, trg = _masked_tiles(inp_ref, trg_ref, block_rows, valid_rows)
    si_ref[0] = jnp.sum(inp, axis=0, keepdims=True)   # (1, 128)
    st_ref[0] = jnp.sum(trg, axis=0, keepdims=True)   # (1, 128)


def _partial_kld_kernel(inv_ref, inp_ref, trg_ref, out_ref, *, block_rows, valid_rows):
    """Per-block lane-wise partial KLD sums given global 1/sum scalars (SMEM)."""
    inp, trg = _masked_tiles(inp_ref, trg_ref, block_rows, valid_rows)
    inp_n = inp * inv_ref[0]
    trg_n = trg * inv_ref[1]
    term = trg_n * jnp.log(_EPS + trg_n / (inp_n + _EPS))
    out_ref[0] = jnp.sum(term, axis=0, keepdims=True)  # (1, 128)


def _kld_tiled(inp2d, trg2d, block_rows):
    rows = inp2d.shape[0]
    g = pl.cdiv(rows, block_rows)
    grid = (g,)

    tile = pl.BlockSpec((block_rows, _LANE), lambda i: (i, 0))
    part = pl.BlockSpec((1, 1, _LANE), lambda i: (i, 0, 0))  # lane-dense partials
    smem = pl.BlockSpec(memory_space=pltpu.MemorySpace.SMEM)
    parallel = pltpu.CompilerParams(dimension_semantics=("parallel",))

    # Pass 1: global sums via parallel per-block partials.
    si_part, st_part = pl.pallas_call(
        functools.partial(_partial_sums_kernel,
                          block_rows=block_rows, valid_rows=rows),
        out_shape=(jax.ShapeDtypeStruct((g, 1, _LANE), jnp.float32),
                   jax.ShapeDtypeStruct((g, 1, _LANE), jnp.float32)),
        grid=grid,
        in_specs=[tile, tile],
        out_specs=(part, part),
        compiler_params=parallel,
    )(inp2d, trg2d)

    inv = jnp.stack([1.0 / jnp.sum(si_part), 1.0 / jnp.sum(st_part)])  # (2,) f32

    # Pass 2: KLD reduction given 1/sums (hoisted out of the kernel).
    kld_part = pl.pallas_call(
        functools.partial(_partial_kld_kernel,
                          block_rows=block_rows, valid_rows=rows),
        out_shape=jax.ShapeDtypeStruct((g, 1, _LANE), jnp.float32),
        grid=grid,
        in_specs=[smem, tile, tile],
        out_specs=part,
        compiler_params=parallel,
    )(inv, inp2d, trg2d)

    return jnp.sum(kld_part)


# ---------------------------------------------------------------------------
# Public entry point.
# ---------------------------------------------------------------------------
def kld_loss(inp, trg, *, block_rows=_BLOCK_ROWS):
    """Pallas implementation of KLDLoss.forward(inp, trg). Returns a scalar."""
    inp2d = _to_2d(inp)
    trg2d = _to_2d(trg)
    total_bytes = (inp2d.size + trg2d.size) * 4
    if total_bytes <= _FUSED_MAX_TOTAL_BYTES:
        return _kld_fused(inp2d, trg2d)
    return _kld_tiled(inp2d, trg2d, block_rows)


def kld_loss_ref(inp, trg):
    """Pure-JAX reference matching the PyTorch module exactly."""
    inp = inp.astype(jnp.float32)
    trg = trg.astype(jnp.float32)
    inp_n = inp / jnp.sum(inp)
    trg_n = trg / jnp.sum(trg)
    return jnp.sum(trg_n * jnp.log(_EPS + trg_n / (inp_n + _EPS)))


if __name__ == "__main__":
    key = jax.random.PRNGKey(0)
    k1, k2, k3, k4 = jax.random.split(key, 4)

    # Saliency maps: positive values, NCHW layout.
    shape = (2, 4, 16, 16)
    inp = jax.random.uniform(k1, shape, dtype=jnp.float32, minval=0.01, maxval=1.0)
    trg = jax.random.uniform(k2, shape, dtype=jnp.float32, minval=0.01, maxval=1.0)

    # Fused (VMEM-resident) path.
    out = jax.block_until_ready(kld_loss(inp, trg))
    ref = jax.block_until_ready(kld_loss_ref(inp, trg))
    assert jnp.isfinite(out), "non-finite kernel output (fused)"
    assert abs(float(out) - float(ref)) < 1e-4, (float(out), float(ref))

    # Streaming path (forced with small blocks and a ragged grid to also
    # exercise the in-kernel edge-block masking).
    shape2 = (2, 4, 32, 32)  # 8192 elems -> 64 rows of 128; block_rows=24 -> ragged
    inp2 = jax.random.uniform(k3, shape2, dtype=jnp.float32, minval=0.01, maxval=1.0)
    trg2 = jax.random.uniform(k4, shape2, dtype=jnp.float32, minval=0.01, maxval=1.0)
    out2 = jax.block_until_ready(_kld_tiled(_to_2d(inp2), _to_2d(trg2), block_rows=24))
    ref2 = jax.block_until_ready(kld_loss_ref(inp2, trg2))
    assert jnp.isfinite(out2), "non-finite kernel output (tiled)"
    assert abs(float(out2) - float(ref2)) < 1e-4, (float(out2), float(ref2))

    print("KERNEL_OK")
</pallas_src>

<mosaic_0001>
module attributes {stable_mosaic.version = 11 : i64} {
  func.func @_fused_kernel(%arg0: memref<16x128xf32, #tpu.memory_space<vmem>>, %arg1: memref<16x128xf32, #tpu.memory_space<vmem>>, %arg2: memref<1xf32, #tpu.memory_space<smem>>) attributes {dimension_semantics = [], scalar_prefetch = 0 : i64, scratch_operands = 0 : i64, tpu.core_type = #tpu.core_type<tc>} {
    %c0 = arith.constant 0 : index
    %c0_0 = arith.constant 0 : index
    %0 = vector.load %arg0[%c0, %c0_0] : memref<16x128xf32, #tpu.memory_space<vmem>>, vector<16x128xf32>
    %c0_1 = arith.constant 0 : index
    %c0_2 = arith.constant 0 : index
    %1 = vector.load %arg1[%c0_1, %c0_2] : memref<16x128xf32, #tpu.memory_space<vmem>>, vector<16x128xf32>
    %2 = vector.shape_cast %0 : vector<16x128xf32> to vector<1x16x128xf32>
    %cst = arith.constant dense<0.000000e+00> : vector<1xf32>
    %3 = vector.multi_reduction <add>, %2, %cst [1, 2] : vector<1x16x128xf32> to vector<1xf32>
    %4 = vector.shape_cast %3 : vector<1xf32> to vector<1x1x1xf32>
    %5 = vector.extract %4[0, 0, 0] : f32 from vector<1x1x1xf32>
    %cst_3 = arith.constant 1.000000e+00 : f32
    %6 = arith.divf %cst_3, %5 : f32
    %7 = vector.broadcast %6 : f32 to vector<16x128xf32>
    %8 = arith.mulf %0, %7 : vector<16x128xf32>
    %9 = vector.shape_cast %1 : vector<16x128xf32> to vector<1x16x128xf32>
    %cst_4 = arith.constant dense<0.000000e+00> : vector<1xf32>
    %10 = vector.multi_reduction <add>, %9, %cst_4 [1, 2] : vector<1x16x128xf32> to vector<1xf32>
    %11 = vector.shape_cast %10 : vector<1xf32> to vector<1x1x1xf32>
    %12 = vector.extract %11[0, 0, 0] : f32 from vector<1x1x1xf32>
    %cst_5 = arith.constant 1.000000e+00 : f32
    %13 = arith.divf %cst_5, %12 : f32
    %14 = vector.broadcast %13 : f32 to vector<16x128xf32>
    %15 = arith.mulf %1, %14 : vector<16x128xf32>
    %cst_6 = arith.constant 2.22044605E-16 : f32
    %16 = vector.broadcast %cst_6 : f32 to vector<16x128xf32>
    %17 = arith.addf %8, %16 : vector<16x128xf32>
    %18 = arith.divf %15, %17 : vector<16x128xf32>
    %cst_7 = arith.constant 2.22044605E-16 : f32
    %19 = vector.broadcast %cst_7 : f32 to vector<16x128xf32>
    %20 = arith.addf %19, %18 : vector<16x128xf32>
    %21 = math.log %20 : vector<16x128xf32>
    %22 = arith.mulf %15, %21 : vector<16x128xf32>
    %23 = vector.shape_cast %22 : vector<16x128xf32> to vector<1x16x128xf32>
    %cst_8 = arith.constant dense<0.000000e+00> : vector<1xf32>
    %24 = vector.multi_reduction <add>, %23, %cst_8 [1, 2] : vector<1x16x128xf32> to vector<1xf32>
    %25 = vector.shape_cast %24 : vector<1xf32> to vector<1x1x1xf32>
    %26 = vector.extract %25[0, 0, 0] : f32 from vector<1x1x1xf32>
    %c0_9 = arith.constant 0 : index
    %27 = memref.load %arg2[%c0_9] : memref<1xf32, #tpu.memory_space<smem>>
    memref.store %26, %arg2[%c0_9] : memref<1xf32, #tpu.memory_space<smem>>
    return
  }
}

</mosaic_0001>

<llo_original>
// kernel: tpu_custom_call.1
$region0: #{tpu_custom_call.1}
  #allocation0 [shape = 'u32[]', space=smem, size = 0x4, offset = 0x4, fixed_abs, tag = 'smem constant byte address 0x4 - core index']
  #allocation1 [shape = 'u32[72,128]{1,0:T(1,128)}', space=vmem, size = 0x9000, scoped, tag = 'internal scratch']
  %s0 = inlined_call_operand.hbm [shape: f32[16,128], index: 0, kind: input, shape index: {}]
  %s1 = inlined_call_operand.hbm [shape: f32[16,128], index: 1, kind: input, shape index: {}]
  %s2 = inlined_call_operand.hbm [shape: f32[1], index: 2, kind: output, shape index: {}]
  %s3 = sld [smem:[#allocation0]]
  $region26: #{tpu_custom_call.1} parent=0
    _
  %s5 = ssub.s32 1, %s3
  %s6 = scalar_select 0, %s5, %s3
  $region1: #{tpu_custom_call.1} parent=0
    #allocation2 [shape = 'u8[8192]{0}', space=vmem, size = 0x2000, scoped, tag = 'input window, operand 0, single buffered']
    #allocation3 [shape = 's32[1]{0}', space=sflag, size = 0x4, scoped, tag = 'scoped memory for tpu_custom_call.1']
    #allocation4 [shape = 's32[1]{0}', space=sflag, size = 0x4, scoped, tag = 'scoped memory for tpu_custom_call.1']
    #allocation5 [shape = 'u8[8192]{0}', space=vmem, size = 0x2000, scoped, tag = 'input window, operand 1, single buffered']
    #allocation6 [shape = 's32[1]{0}', space=sflag, size = 0x4, scoped, tag = 'scoped memory for tpu_custom_call.1']
    #allocation7 [shape = 'u8[512]{0}', space=smem, size = 0x200, scoped, tag = 'output window, operand 0, single buffered']
    %7 = vsyncpa [#allocation3], 0
    %8 = vsyncpa [#allocation6], 0
    %9 = vsyncpa [#allocation4], 0
    // Predicated region
    $region2: #{tpu_custom_call.1} parent=1 // pred_check
      _
    $region3: #{tpu_custom_call.1} parent=1 // pred_check_branch
      %11 = sbr.rel (0) target = $region5
    $region4: #{tpu_custom_call.1} parent=1 // pred_region
      %13 = vsyncadd [#allocation3], 0
      %s14 = sshll.u32 %s0, 4
      %s15 = int_to_ptr.hbm [resolvable:$true] %s14
      %s16 = sshll.u32 [#allocation2], 4
      %s17 = int_to_ptr.vmem [resolvable:$true] %s16
      %22 = dma.hbm_to_vmem [thread:$0]  %s15, 256, %s17, [#allocation3], 128, 128, 8
    $region5: #{tpu_custom_call.1} parent=1 // pred_fallthru
      _
    // Predicated region
    $region6: #{tpu_custom_call.1} parent=1 // pred_check
      _
    $region7: #{tpu_custom_call.1} parent=1 // pred_check_branch
      %24 = sbr.rel (0) target = $region9
    $region8: #{tpu_custom_call.1} parent=1 // pred_region
      %26 = vsyncadd [#allocation6], 0
      %s27 = sshll.u32 %s1, 4
      %s28 = int_to_ptr.hbm [resolvable:$true] %s27
      %s29 = sshll.u32 [#allocation5], 4
      %s30 = int_to_ptr.vmem [resolvable:$true] %s29
      %35 = dma.hbm_to_vmem [thread:$0]  %s28, 256, %s30, [#allocation6], 128, 128, 8
    $region9: #{tpu_custom_call.1} parent=1 // pred_fallthru
      _
    // Predicated region
    $region10: #{tpu_custom_call.1} parent=1 // pred_check
      _
    $region11: #{tpu_custom_call.1} parent=1 // pred_check_branch
      %37 = sbr.rel (0) target = $region13
    $region12: #{tpu_custom_call.1} parent=1 // pred_region
      %39 = dma.done [#allocation3], 256
    $region13: #{tpu_custom_call.1} parent=1 // pred_fallthru
      _
    // Predicated region
    $region14: #{tpu_custom_call.1} parent=1 // pred_check
      _
    $region15: #{tpu_custom_call.1} parent=1 // pred_check_branch
      %41 = sbr.rel (0) target = $region17
    $region16: #{tpu_custom_call.1} parent=1 // pred_region
      %43 = dma.done [#allocation6], 256
    $region17: #{tpu_custom_call.1} parent=1 // pred_fallthru
      _
    %v44 = vld [vmem:[#allocation2] sm:$0xff]
    %v45 = vld [vmem:[#allocation2 + $0x8] sm:$0xff]
    %v46 = vld [vmem:[#allocation5] sm:$0xff]
    %v47 = vld [vmem:[#allocation5 + $0x8] sm:$0xff]
    %v48 = vadd.f32 %v44, %v45
    %49 = vadd.xlane.f32.xlu0 %v48
    %v50 = vpop.xlane.xlu0 %49
    %v51 = vrot.slane %v50, 4
    %v52 = vadd.f32 %v50, %v51
    %v53 = vrot.slane %v52, 2
    %v54 = vadd.f32 %v52, %v53
    %v55 = vrot.slane %v54, 1
    %v56 = vadd.f32 %v54, %v55
    %s57 = vtos %v56
    %v58 = vstv %s57
    %v59 = vrcp.pop %v58
    %v60 = vmul.f32 %v58, %v59
    %v61 = vsub.f32 1.0, %v60
    %v62 = vmul.f32 %v59, %v61
    %v63 = vadd.f32 %v59, %v62
    %vm64 = vweird.f32 %v58
    %vm65 = vweird.f32 %v59
    %vm66 = vmor %vm64, %vm65
    %v67 = vsel %vm66, %v59, %v63
    %v68 = vand.u32 2147483647, %v58
    %vm69 = vcmp.eq.f32.partialorder %v68, 8.507059e+37
    %v70 = vand.u32 %v58, 2147483648
    %v71 = vor.u32 1.1754944e-38, %v70
    %v72 = vsel %vm69, %v71, %v67
    %s73 = vtos %v72
    %v74 = vstv %s73
    %v75 = vmul.f32 %v44, %v74
    %v76 = vmul.f32 %v45, %v74
    %v77 = vadd.f32 %v46, %v47
    %78 = vadd.xlane.f32.xlu0 %v77
    %v79 = vpop.xlane.xlu0 %78
    %v80 = vrot.slane %v79, 4
    %v81 = vadd.f32 %v79, %v80
    %v82 = vrot.slane %v81, 2
    %v83 = vadd.f32 %v81, %v82
    %v84 = vrot.slane %v83, 1
    %v85 = vadd.f32 %v83, %v84
    %s86 = vtos %v85
    %v87 = vstv %s86
    %v88 = vrcp.pop %v87
    %v89 = vmul.f32 %v87, %v88
    %v90 = vsub.f32 1.0, %v89
    %v91 = vmul.f32 %v88, %v90
    %v92 = vadd.f32 %v88, %v91
    %vm93 = vweird.f32 %v87
    %vm94 = vweird.f32 %v88
    %vm95 = vmor %vm93, %vm94
    %v96 = vsel %vm95, %v88, %v92
    %v97 = vand.u32 2147483647, %v87
    %vm98 = vcmp.eq.f32.partialorder %v97, 8.507059e+37
    %v99 = vand.u32 %v87, 2147483648
    %v100 = vor.u32 1.1754944e-38, %v99
    %v101 = vsel %vm98, %v100, %v96
    %s102 = vtos %v101
    %v103 = vstv %s102
    %v104 = vmul.f32 %v46, %v103
    %v105 = vmul.f32 %v47, %v103
    %v106 = vadd.f32 %v75, 2.220446e-16
    %v107 = vadd.f32 %v76, 2.220446e-16
    %v108 = vrcp.pop %v106
    %v109 = vmul.f32 %v106, %v108
    %v110 = vsub.f32 1.0, %v109
    %v111 = vmul.f32 %v108, %v110
    %v112 = vadd.f32 %v108, %v111
    %vm113 = vweird.f32 %v106
    %vm114 = vweird.f32 %v108
    %vm115 = vmor %vm113, %vm114
    %v116 = vsel %vm115, %v108, %v112
    %v117 = vand.u32 2147483647, %v106
    %vm118 = vcmp.eq.f32.partialorder %v117, 8.507059e+37
    %v119 = vand.u32 %v106, 2147483648
    %v120 = vor.u32 1.1754944e-38, %v119
    %v121 = vsel %vm118, %v120, %v116
    %v122 = vmul.f32 %v104, %v121
    %v123 = vrcp.pop %v107
    %v124 = vmul.f32 %v107, %v123
    %v125 = vsub.f32 1.0, %v124
    %v126 = vmul.f32 %v123, %v125
    %v127 = vadd.f32 %v123, %v126
    %vm128 = vweird.f32 %v107
    %vm129 = vweird.f32 %v123
    %vm130 = vmor %vm128, %vm129
    %v131 = vsel %vm130, %v123, %v127
    %v132 = vand.u32 2147483647, %v107
    %vm133 = vcmp.eq.f32.partialorder %v132, 8.507059e+37
    %v134 = vand.u32 %v107, 2147483648
    %v135 = vor.u32 1.1754944e-38, %v134
    %v136 = vsel %vm133, %v135, %v131
    %v137 = vmul.f32 %v105, %v136
    %v138 = vadd.f32 %v122, 2.220446e-16
    %v139 = vadd.f32 %v137, 2.220446e-16
    %v140 = vlog2.pop %v138
    %v141 = vmul.f32 %v140, 0.6931472
    %v142 = vlog2.pop %v139
    %v143 = vmul.f32 %v142, 0.6931472
    %v144 = vmul.f32 %v104, %v141
    %v145 = vmul.f32 %v105, %v143
    %v146 = vadd.f32 %v144, %v145
    %147 = vadd.xlane.f32.xlu0 %v146
    %v148 = vpop.xlane.xlu0 %147
    %v149 = vrot.slane %v148, 4
    %v150 = vadd.f32 %v148, %v149
    %v151 = vrot.slane %v150, 2
    %v152 = vadd.f32 %v150, %v151
    %v153 = vrot.slane %v152, 1
    %v154 = vadd.f32 %v152, %v153
    %s155 = vtos %v154
    %s156 = scalar_lea.smem [#allocation7], 0
    %157 = sst [smem:[%s156]] %s155
    // Predicated region
    $region18: #{tpu_custom_call.1} parent=1 // pred_check
      _
    $region19: #{tpu_custom_call.1} parent=1 // pred_check_branch
      %159 = sbr.rel (0) target = $region21
    $region20: #{tpu_custom_call.1} parent=1 // pred_region
      %161 = vsyncadd [#allocation4], 0
      %s163 = sshll.u32 %s2, 4
      %s164 = int_to_ptr.hbm [resolvable:$true] %s163
      %166 = dma.smem_to_hbm [#allocation7], 16, %s164, [#allocation4]
    $region21: #{tpu_custom_call.1} parent=1 // pred_fallthru
      _
    // Predicated region
    $region22: #{tpu_custom_call.1} parent=1 // pred_check
      _
    $region23: #{tpu_custom_call.1} parent=1 // pred_check_branch
      %168 = sbr.rel (0) target = $region25
    $region24: #{tpu_custom_call.1} parent=1 // pred_region
      %170 = dma.done [#allocation4], 16
    $region25: #{tpu_custom_call.1} parent=1 // pred_fallthru
      _
    %171 = sfence
    %172 = vsyncpa [#allocation3], 1
    %173 = vsyncpa [#allocation6], 1
    %174 = vsyncpa [#allocation4], 1

</llo_original>
